<compile_context>
chip_gen: v6e
topology: v6e:2x2x1
jax: 0.10.0
libtpu: 0.0.40
codegen_flags: <defaults>
</compile_context>

<pallas_src>
import functools
import math

import jax
import jax.numpy as jnp
from jax.experimental import pallas as pl
from jax.experimental.pallas import tpu as pltpu


_NEG_INF = -1e30  # finite "minus infinity": avoids inf/NaN arithmetic entirely


def _round_up(x: int, m: int) -> int:
    return ((x + m - 1) // m) * m


def _ntxent_kernel(q_ref, k_ref, pos_ref, o_ref, m_ref, l_ref, *,
                   inv_t: float, n_valid: int, tq: int, tk: int):
    """One (query-tile, key-tile) step of the NT-Xent denominator reduction.

    q_ref  : Ref[(TQ, Cp)]  bf16 query rows of the concatenated embeddings
    k_ref  : Ref[(TK, Cp)]  bf16 key rows of the concatenated embeddings
    pos_ref: Ref[(TQ, 1)]   f32 positive-pair dot products  <x1_i, x2_i>
    o_ref  : Ref[(TQ, 1)]   f32 per-row loss  log(denom_i) - pos_i / t
    m_ref, l_ref : VMEM scratch (TQ, 1) f32 — running row max / rescaled sum.
    """
    qi = pl.program_id(0)
    ki = pl.program_id(1)
    nk = pl.num_programs(1)

    @pl.when(ki == 0)
    def _init():
        m_ref[...] = jnp.full((tq, 1), _NEG_INF, jnp.float32)
        l_ref[...] = jnp.zeros((tq, 1), jnp.float32)

    # MXU: contract the feature dim of both operands (no transposed copy).
    s = jax.lax.dot_general(
        q_ref[...], k_ref[...],
        dimension_numbers=(((1,), (1,)), ((), ())),
        preferred_element_type=jnp.float32,
    ) * inv_t                                                    # (TQ, TK) f32

    # Mask the self-similarity diagonal and any padded key columns (tile-local
    # masks only — never an (M, M) iota).
    row_g = qi * tq + jax.lax.broadcasted_iota(jnp.int32, (tq, tk), 0)
    col_g = ki * tk + jax.lax.broadcasted_iota(jnp.int32, (tq, tk), 1)
    invalid = (row_g == col_g) | (col_g >= n_valid)
    s = jnp.where(invalid, _NEG_INF, s)

    # Online log-sum-exp accumulation of the denominator.
    m_prev = m_ref[...]                                          # (TQ, 1)
    m_new = jnp.maximum(m_prev, jnp.max(s, axis=1, keepdims=True))
    alpha = jnp.exp(m_prev - m_new)
    p = jnp.exp(s - m_new)
    l_ref[...] = alpha * l_ref[...] + jnp.sum(p, axis=1, keepdims=True)
    m_ref[...] = m_new

    @pl.when(ki == nk - 1)
    def _finalize():
        # -log(pos / denom) = log(denom) - pos_logit / t   (one log, no exp/div)
        log_denom = m_ref[...] + jnp.log(l_ref[...])
        o_ref[...] = log_denom - pos_ref[...] * inv_t


def ntxent_loss(x1: jax.Array, x2: jax.Array, temperature: float, *,
                tq: int = 256, tk: int = 256,
                compute_dtype=jnp.bfloat16) -> jax.Array:
    """NT-Xent loss matching NtxentLoss(temperature).forward([x1, x2])."""
    assert x1.shape == x2.shape and x1.ndim == 2
    N, C = x1.shape
    M = 2 * N

    # Positive-pair logits in f32 (tiny O(N*C) op; same value for row i and i+N).
    pos = jnp.sum(x1.astype(jnp.float32) * x2.astype(jnp.float32), axis=-1)
    pos = jnp.concatenate([pos, pos], axis=0)                    # (M,)

    # Concatenated embeddings, fed to the MXU in bf16 (f32 accumulation inside).
    out = jnp.concatenate([x1, x2], axis=0).astype(compute_dtype)

    # Tile / padding bookkeeping.
    tq = _round_up(min(int(tq), _round_up(M, 8)), 8)
    tk = _round_up(min(int(tk), _round_up(M, 8)), 8)
    M_pad = _round_up(M, math.lcm(tq, tk))
    C_pad = _round_up(max(C, 128), 128)   # zero-padded features: dots unchanged

    out_p = jnp.zeros((M_pad, C_pad), compute_dtype).at[:M, :C].set(out)
    pos_p = jnp.zeros((M_pad, 1), jnp.float32).at[:M, 0].set(pos)

    n_q = M_pad // tq
    n_k = M_pad // tk
    itemsize = jnp.dtype(compute_dtype).itemsize

    kernel = functools.partial(
        _ntxent_kernel,
        inv_t=1.0 / float(temperature),
        n_valid=M, tq=tq, tk=tk,
    )

    per_row = pl.pallas_call(
        kernel,
        out_shape=jax.ShapeDtypeStruct((M_pad, 1), jnp.float32),
        grid_spec=pltpu.PrefetchScalarGridSpec(
            num_scalar_prefetch=0,
            grid=(n_q, n_k),
            in_specs=[
                pl.BlockSpec((tq, C_pad), lambda i, k: (i, 0)),   # query rows
                pl.BlockSpec((tk, C_pad), lambda i, k: (k, 0)),   # key rows
                pl.BlockSpec((tq, 1), lambda i, k: (i, 0)),       # pos logits
            ],
            out_specs=pl.BlockSpec((tq, 1), lambda i, k: (i, 0)),
            scratch_shapes=[
                pltpu.VMEM((tq, 1), jnp.float32),                 # running max
                pltpu.VMEM((tq, 1), jnp.float32),                 # running sum
            ],
        ),
        compiler_params=pltpu.CompilerParams(
            dimension_semantics=("parallel", "arbitrary"),
        ),
        cost_estimate=pl.CostEstimate(
            flops=2 * M_pad * M_pad * C_pad,
            transcendentals=M_pad * M_pad,
            bytes_accessed=(n_q * M_pad * C_pad * itemsize   # key panels re-read per q block
                            + M_pad * C_pad * itemsize       # query rows
                            + 2 * M_pad * 4),                # pos in + per-row loss out
        ),
    )(out_p, out_p, pos_p)

    # Drop padded rows; scalar mean over the 2N real rows.
    return jnp.mean(per_row[:M, 0])


def _ntxent_loss_ref(x1, x2, temperature):
    """Pure-JAX reference faithful to the PyTorch forward.

    Note: torch.masked_select *drops* the diagonal (it never multiplies an
    overflowed exp() by 0), so the reference masks with where(), not mask*sim —
    that multiply was the source of the previous NaN.
    """
    out = jnp.concatenate([x1, x2], axis=0).astype(jnp.float32)
    M = out.shape[0]
    sim = jnp.exp(out @ out.T / temperature)
    off_diag = ~jnp.eye(M, dtype=bool)
    denom = jnp.sum(jnp.where(off_diag, sim, 0.0), axis=-1)
    pos = jnp.exp(jnp.sum(x1.astype(jnp.float32) * x2.astype(jnp.float32),
                          axis=-1) / temperature)
    pos = jnp.concatenate([pos, pos], axis=0)
    return jnp.mean(-jnp.log(pos / denom))


if __name__ == "__main__":
    # NtxentLoss(temperature).forward([x1, x2]) with x1, x2 of shape (N, C).
    N, C = 20, 48
    temperature = 0.5

    key = jax.random.PRNGKey(0)
    k1, k2 = jax.random.split(key)
    x1 = jax.random.normal(k1, (N, C), dtype=jnp.float32)
    x2 = jax.random.normal(k2, (N, C), dtype=jnp.float32)
    # SimCLR feeds L2-normalized projections (also keeps the naive exp()
    # reference finite); the kernel itself is stable either way.
    x1 = x1 / jnp.linalg.norm(x1, axis=-1, keepdims=True)
    x2 = x2 / jnp.linalg.norm(x2, axis=-1, keepdims=True)

    # Small tiles so the tiny test exercises multi-tile accumulation, the
    # diagonal mask across tiles, and the row-padding path (M=40 -> M_pad=64).
    loss = ntxent_loss(x1, x2, temperature, tq=32, tk=32)
    loss = jax.block_until_ready(loss)

    ref = _ntxent_loss_ref(x1, x2, temperature)
    assert bool(jnp.isfinite(loss)), loss
    # bf16 MXU inputs (f32 accumulate) -> compare with a bf16-appropriate tolerance.
    assert jnp.allclose(loss, ref, rtol=2e-2, atol=2e-2), (loss, ref)

    print("KERNEL_OK")
</pallas_src>

<mosaic_0001>
module attributes {stable_mosaic.version = 11 : i64} {
  func.func @_ntxent_kernel(%arg0: i32, %arg1: i32, %arg2: memref<32x128xbf16, #tpu.memory_space<vmem>>, %arg3: memref<32x128xbf16, #tpu.memory_space<vmem>>, %arg4: memref<32x1xf32, #tpu.memory_space<vmem>>, %arg5: memref<32x1xf32, #tpu.memory_space<vmem>>, %arg6: memref<32x1xf32, #tpu.memory_space<vmem>>, %arg7: memref<32x1xf32, #tpu.memory_space<vmem>>) attributes {dimension_semantics = [#tpu.dimension_semantics<parallel>, #tpu.dimension_semantics<arbitrary>], iteration_bounds = array<i64: 2, 2>, scalar_prefetch = 0 : i64, scratch_operands = 2 : i64, tpu.core_type = #tpu.core_type<tc>, window_params = [{transform_indices = @transform_0, window_bounds = array<i64: 32, 128>}, {transform_indices = @transform_1, window_bounds = array<i64: 32, 128>}, {transform_indices = @transform_2, window_bounds = array<i64: 32, 1>}, {transform_indices = @transform_3, window_bounds = array<i64: 32, 1>}]} {
    %c0_i32 = arith.constant 0 : i32
    %0 = arith.cmpi eq, %arg1, %c0_i32 : i32
    %1 = arith.extui %0 : i1 to i32
    %c0_i32_0 = arith.constant 0 : i32
    %2 = arith.cmpi ne, %1, %c0_i32_0 : i32
    scf.if %2 {
      %cst_18 = arith.constant -1.000000e+30 : f32
      %41 = vector.broadcast %cst_18 : f32 to vector<32x1xf32>
      %c0_19 = arith.constant 0 : index
      %c0_20 = arith.constant 0 : index
      %42 = vector.load %arg6[%c0_19, %c0_20] : memref<32x1xf32, #tpu.memory_space<vmem>>, vector<32x1xf32>
      tpu.vector_store %arg6[%c0_19, %c0_20], %41 {strides = array<i32>} : memref<32x1xf32, #tpu.memory_space<vmem>>, vector<32x1xf32>,
      %cst_21 = arith.constant 0.000000e+00 : f32
      %43 = vector.broadcast %cst_21 : f32 to vector<32x1xf32>
      %c0_22 = arith.constant 0 : index
      %c0_23 = arith.constant 0 : index
      %44 = vector.load %arg7[%c0_22, %c0_23] : memref<32x1xf32, #tpu.memory_space<vmem>>, vector<32x1xf32>
      tpu.vector_store %arg7[%c0_22, %c0_23], %43 {strides = array<i32>} : memref<32x1xf32, #tpu.memory_space<vmem>>, vector<32x1xf32>,
    } else {
    }
    %c0 = arith.constant 0 : index
    %c0_1 = arith.constant 0 : index
    %3 = vector.load %arg2[%c0, %c0_1] : memref<32x128xbf16, #tpu.memory_space<vmem>>, vector<32x128xbf16>
    %c0_2 = arith.constant 0 : index
    %c0_3 = arith.constant 0 : index
    %4 = vector.load %arg3[%c0_2, %c0_3] : memref<32x128xbf16, #tpu.memory_space<vmem>>, vector<32x128xbf16>
    %cst = arith.constant dense<0.000000e+00> : vector<32x32xf32>
    %5 = tpu.matmul %3, %4, %cst {dimension_numbers = #tpu.dot_dimension_numbers<[1], [1], [0], [0], [0, 0, 1, 0], [], []>} : vector<32x128xbf16>, vector<32x128xbf16>, vector<32x32xf32> -> vector<32x32xf32>
    %cst_4 = arith.constant 2.000000e+00 : f32
    %6 = vector.broadcast %cst_4 : f32 to vector<32x32xf32>
    %7 = arith.mulf %5, %6 : vector<32x32xf32>
    %c32_i32 = arith.constant 32 : i32
    %8 = arith.muli %arg0, %c32_i32 : i32
    %9 = tpu.iota {dimensions = array<i32: 0>} : vector<32x32xi32>
    %10 = vector.broadcast %8 : i32 to vector<32x32xi32>
    %11 = arith.addi %10, %9 : vector<32x32xi32>
    %c32_i32_5 = arith.constant 32 : i32
    %12 = arith.muli %arg1, %c32_i32_5 : i32
    %13 = tpu.iota {dimensions = array<i32: 1>} : vector<32x32xi32>
    %14 = vector.broadcast %12 : i32 to vector<32x32xi32>
    %15 = arith.addi %14, %13 : vector<32x32xi32>
    %16 = arith.cmpi eq, %11, %15 : vector<32x32xi32>
    %c40_i32 = arith.constant 40 : i32
    %17 = vector.broadcast %c40_i32 : i32 to vector<32x32xi32>
    %18 = arith.cmpi sge, %15, %17 : vector<32x32xi32>
    %19 = arith.ori %16, %18 : vector<32x32xi1>
    %cst_6 = arith.constant -1.000000e+30 : f32
    %20 = vector.broadcast %cst_6 : f32 to vector<32x32xf32>
    %21 = arith.select %19, %20, %7 : vector<32x32xi1>, vector<32x32xf32>
    %c0_7 = arith.constant 0 : index
    %c0_8 = arith.constant 0 : index
    %22 = vector.load %arg6[%c0_7, %c0_8] : memref<32x1xf32, #tpu.memory_space<vmem>>, vector<32x1xf32>
    %cst_9 = arith.constant dense<0xFF800000> : vector<32xf32>
    %23 = vector.multi_reduction <maximumf>, %21, %cst_9 [1] : vector<32x32xf32> to vector<32xf32>
    %24 = vector.shape_cast %23 : vector<32xf32> to vector<32x1xf32>
    %25 = arith.maximumf %22, %24 : vector<32x1xf32>
    %26 = arith.subf %22, %25 : vector<32x1xf32>
    %27 = math.exp %26 : vector<32x1xf32>
    %28 = vector.broadcast %25 : vector<32x1xf32> to vector<32x32xf32>
    %29 = arith.subf %21, %28 : vector<32x32xf32>
    %30 = math.exp %29 : vector<32x32xf32>
    %c0_10 = arith.constant 0 : index
    %c0_11 = arith.constant 0 : index
    %31 = vector.load %arg7[%c0_10, %c0_11] : memref<32x1xf32, #tpu.memory_space<vmem>>, vector<32x1xf32>
    %32 = arith.mulf %27, %31 : vector<32x1xf32>
    %cst_12 = arith.constant dense<0.000000e+00> : vector<32xf32>
    %33 = vector.multi_reduction <add>, %30, %cst_12 [1] : vector<32x32xf32> to vector<32xf32>
    %34 = vector.shape_cast %33 : vector<32xf32> to vector<32x1xf32>
    %35 = arith.addf %32, %34 : vector<32x1xf32>
    %c0_13 = arith.constant 0 : index
    %c0_14 = arith.constant 0 : index
    %36 = vector.load %arg7[%c0_13, %c0_14] : memref<32x1xf32, #tpu.memory_space<vmem>>, vector<32x1xf32>
    tpu.vector_store %arg7[%c0_13, %c0_14], %35 {strides = array<i32>} : memref<32x1xf32, #tpu.memory_space<vmem>>, vector<32x1xf32>,
    %c0_15 = arith.constant 0 : index
    %c0_16 = arith.constant 0 : index
    %37 = vector.load %arg6[%c0_15, %c0_16] : memref<32x1xf32, #tpu.memory_space<vmem>>, vector<32x1xf32>
    tpu.vector_store %arg6[%c0_15, %c0_16], %25 {strides = array<i32>} : memref<32x1xf32, #tpu.memory_space<vmem>>, vector<32x1xf32>,
    %c1_i32 = arith.constant 1 : i32
    %38 = arith.cmpi eq, %arg1, %c1_i32 : i32
    %39 = arith.extui %38 : i1 to i32
    %c0_i32_17 = arith.constant 0 : i32
    %40 = arith.cmpi ne, %39, %c0_i32_17 : i32
    scf.if %40 {
      %c0_18 = arith.constant 0 : index
      %c0_19 = arith.constant 0 : index
      %41 = vector.load %arg6[%c0_18, %c0_19] : memref<32x1xf32, #tpu.memory_space<vmem>>, vector<32x1xf32>
      %c0_20 = arith.constant 0 : index
      %c0_21 = arith.constant 0 : index
      %42 = vector.load %arg7[%c0_20, %c0_21] : memref<32x1xf32, #tpu.memory_space<vmem>>, vector<32x1xf32>
      %43 = math.log %42 : vector<32x1xf32>
      %44 = arith.addf %41, %43 : vector<32x1xf32>
      %c0_22 = arith.constant 0 : index
      %c0_23 = arith.constant 0 : index
      %45 = vector.load %arg4[%c0_22, %c0_23] : memref<32x1xf32, #tpu.memory_space<vmem>>, vector<32x1xf32>
      %cst_24 = arith.constant 2.000000e+00 : f32
      %46 = vector.broadcast %cst_24 : f32 to vector<32x1xf32>
      %47 = arith.mulf %45, %46 : vector<32x1xf32>
      %48 = arith.subf %44, %47 : vector<32x1xf32>
      %c0_25 = arith.constant 0 : index
      %c0_26 = arith.constant 0 : index
      %49 = vector.load %arg5[%c0_25, %c0_26] : memref<32x1xf32, #tpu.memory_space<vmem>>, vector<32x1xf32>
      tpu.vector_store %arg5[%c0_25, %c0_26], %48 {strides = array<i32>} : memref<32x1xf32, #tpu.memory_space<vmem>>, vector<32x1xf32>,
    } else {
    }
    return
  }
  func.func @transform_0(%arg0: i32, %arg1: i32) -> (i32, i32) {
    %c0_i32 = arith.constant 0 : i32
    %c0_i32_0 = arith.constant 0 : i32
    return %arg0, %c0_i32 : i32, i32
  }
  func.func @transform_1(%arg0: i32, %arg1: i32) -> (i32, i32) {
    %c0_i32 = arith.constant 0 : i32
    %c0_i32_0 = arith.constant 0 : i32
    return %arg1, %c0_i32 : i32, i32
  }
  func.func @transform_2(%arg0: i32, %arg1: i32) -> (i32, i32) {
    %c0_i32 = arith.constant 0 : i32
    %c0_i32_0 = arith.constant 0 : i32
    return %arg0, %c0_i32 : i32, i32
  }
  func.func @transform_3(%arg0: i32, %arg1: i32) -> (i32, i32) {
    %c0_i32 = arith.constant 0 : i32
    %c0_i32_0 = arith.constant 0 : i32
    return %arg0, %c0_i32 : i32, i32
  }
}

</mosaic_0001>

<llo_original>
// kernel: tpu_custom_call.1
$region0: #{tpu_custom_call.1}
  #allocation0 [shape = 'u32[]', space=smem, size = 0x4, offset = 0x4, fixed_abs, tag = 'smem constant byte address 0x4 - core index']
  #allocation1 [shape = 'u32[144,128]{1,0:T(1,128)}', space=vmem, size = 0x12000, scoped, tag = 'internal scratch']
  #allocation2 [shape = 'f32[32,1]{1,0:T(8,128)}', space=vmem, size = 0x4000, scoped, tag = 'scratch operand']
  #allocation3 [shape = 'f32[32,1]{1,0:T(8,128)}', space=vmem, size = 0x4000, scoped, tag = 'scratch operand']
  %s0 = inlined_call_operand.vmem [shape: bf16[64,128], index: 0, kind: input, shape index: {}]
  %s1 = inlined_call_operand.vmem [shape: bf16[64,128], index: 1, kind: input, shape index: {}]
  %s2 = inlined_call_operand.vmem [shape: f32[64,1], index: 2, kind: input, shape index: {}]
  %s3 = inlined_call_operand.vmem [shape: f32[64,1], index: 3, kind: output, shape index: {}]
  %s4 = sld [smem:[#allocation0]]
  $region53: #{tpu_custom_call.1} parent=0
    _
  %s6 = ssub.s32 1, %s4
  %s7 = scalar_select 0, %s6, %s4
  loop: start=0, step=1, limit=6
  $region2: #{tpu_custom_call.1} parent=0 // loop_pre_header
    _
  $region3: #{tpu_custom_call.1} parent=0 // loop_header
    %s9 = sphi 0, %s13
    %p10 = scmp.ge.s32.totalorder %s9, 6
    %s16 = sphi 0, %s28
    %s17 = sphi 0, %s24
    %s18 = sphi 0, %s16
    %s19 = sphi 0, %s17
    %s20 = sphi 0, %s18
    %s21 = sphi 0, %s19
    %s31 = sphi 0, %s33
    %s34 = sphi 0, %s31
    %s35 = sphi 0, %s34
    %s51 = sphi 0, %s35
    %s57 = sphi 0, %s59
    %s60 = sphi 0, %s57
    %s61 = sphi 0, %s60
    %s77 = sphi 0, %s61
    %s83 = sphi 0, %s85
    %s86 = sphi 0, %s83
    %s87 = sphi 0, %s86
    %s103 = sphi 0, %s87
    %s109 = sphi 0, %s111
    %s112 = sphi 0, %s109
    %s113 = sphi 0, %s112
    %s129 = sphi 0, %s113
  $region4: #{tpu_custom_call.1} parent=0 // loop_header_branch
    %12 = sbr.rel (%p10) target = $region8
  $region5: #{tpu_custom_call.1} parent=0 // loop_body
    %s14 = ssub.s32 %s9, 1
    %s15 = ssub.s32 %s9, 2
    %s22 = sadd.s32 1, %s17
    %p23 = scmp.ge.s32.totalorder %s22, 2
    %s24 = scalar_select %p23, 0, %s22
    %s25 = sadd.s32 1, %s16
    %s26 = scalar_select %p23, %s25, %s16
    %p27 = scmp.ge.s32.totalorder %s26, 2
    %s28 = scalar_select %p27, 0, %s26
    %s29 = ssub.s32 %s16, %s28
    %p30 = scmp.eq.s32.totalorder %s29, 0
    %s32 = sadd.s32 %s31, 1
    %s33 = scalar_select %p30, %s31, %s32
    %p36 = pneg %p30
    %p37 = scmp.eq.s32.totalorder %s9, 3
    %p38 = por %p36, %p37
    %p39 = scmp.ne.s32.totalorder %s31, %s34
    %p40 = scmp.eq.s32.totalorder %s9, 0
    %p41 = por %p39, %p40
    %p42 = scmp.ne.s32.totalorder %s31, %s34
    %p43 = scmp.eq.s32.totalorder %s14, 3
    %p44 = por %p42, %p43
    %p45 = scmp.ne.s32.totalorder %s34, %s35
    %p46 = scmp.eq.s32.totalorder %s14, 0
    %p47 = por %p45, %p46
    %p48 = scmp.ne.s32.totalorder %s34, %s35
    %p49 = scmp.eq.s32.totalorder %s15, 3
    %p50 = por %p48, %p49
    %p52 = scmp.ne.s32.totalorder %s35, %s51
    %p53 = scmp.eq.s32.totalorder %s15, 0
    %p54 = por %p52, %p53
    %s55 = ssub.s32 %s17, %s24
    %p56 = scmp.eq.s32.totalorder %s55, 0
    %s58 = sadd.s32 %s57, 1
    %s59 = scalar_select %p56, %s57, %s58
    %p62 = pneg %p56
    %p63 = scmp.eq.s32.totalorder %s9, 3
    %p64 = por %p62, %p63
    %p65 = scmp.ne.s32.totalorder %s57, %s60
    %p66 = scmp.eq.s32.totalorder %s9, 0
    %p67 = por %p65, %p66
    %p68 = scmp.ne.s32.totalorder %s57, %s60
    %p69 = scmp.eq.s32.totalorder %s14, 3
    %p70 = por %p68, %p69
    %p71 = scmp.ne.s32.totalorder %s60, %s61
    %p72 = scmp.eq.s32.totalorder %s14, 0
    %p73 = por %p71, %p72
    %p74 = scmp.ne.s32.totalorder %s60, %s61
    %p75 = scmp.eq.s32.totalorder %s15, 3
    %p76 = por %p74, %p75
    %p78 = scmp.ne.s32.totalorder %s61, %s77
    %p79 = scmp.eq.s32.totalorder %s15, 0
    %p80 = por %p78, %p79
    %s81 = ssub.s32 %s16, %s28
    %p82 = scmp.eq.s32.totalorder %s81, 0
    %s84 = sadd.s32 %s83, 1
    %s85 = scalar_select %p82, %s83, %s84
    %p88 = pneg %p82
    %p89 = scmp.eq.s32.totalorder %s9, 3
    %p90 = por %p88, %p89
    %p91 = scmp.ne.s32.totalorder %s83, %s86
    %p92 = scmp.eq.s32.totalorder %s9, 0
    %p93 = por %p91, %p92
    %p94 = scmp.ne.s32.totalorder %s83, %s86
    %p95 = scmp.eq.s32.totalorder %s14, 3
    %p96 = por %p94, %p95
    %p97 = scmp.ne.s32.totalorder %s86, %s87
    %p98 = scmp.eq.s32.totalorder %s14, 0
    %p99 = por %p97, %p98
    %p100 = scmp.ne.s32.totalorder %s86, %s87
    %p101 = scmp.eq.s32.totalorder %s15, 3
    %p102 = por %p100, %p101
    %p104 = scmp.ne.s32.totalorder %s87, %s103
    %p105 = scmp.eq.s32.totalorder %s15, 0
    %p106 = por %p104, %p105
    %s107 = ssub.s32 %s16, %s28
    %p108 = scmp.eq.s32.totalorder %s107, 0
    %s110 = sadd.s32 %s109, 1
    %s111 = scalar_select %p108, %s109, %s110
    %p114 = pneg %p108
    %p115 = scmp.eq.s32.totalorder %s9, 3
    %p116 = por %p114, %p115
    %p117 = scmp.ne.s32.totalorder %s109, %s112
    %p118 = scmp.eq.s32.totalorder %s9, 0
    %p119 = por %p117, %p118
    %p120 = scmp.ne.s32.totalorder %s109, %s112
    %p121 = scmp.eq.s32.totalorder %s14, 3
    %p122 = por %p120, %p121
    %p123 = scmp.ne.s32.totalorder %s112, %s113
    %p124 = scmp.eq.s32.totalorder %s14, 0
    %p125 = por %p123, %p124
    %p126 = scmp.ne.s32.totalorder %s112, %s113
    %p127 = scmp.eq.s32.totalorder %s15, 3
    %p128 = por %p126, %p127
    %p130 = scmp.ne.s32.totalorder %s113, %s129
    %p131 = scmp.eq.s32.totalorder %s15, 0
    %p132 = por %p130, %p131
    %p133 = scmp.le.s32.totalorder 1, %s9
    %p134 = scmp.lt.s32.totalorder %s9, 5
    %p135 = pnand %p133, %p134
    %p136 = pneg %p135
    // Predicated region
    $region9: #{tpu_custom_call.1} parent=5 // pred_check
      _
    $region10: #{tpu_custom_call.1} parent=5 // pred_check_branch
      %138 = sbr.rel (%p135) target = $region12
    $region11: #{tpu_custom_call.1} parent=5 // pred_region
      %s139 = ssub.s32 %s9, 1
    $region12: #{tpu_custom_call.1} parent=5 // pred_fallthru
      _
    %p140 = scmp.lt.s32.totalorder %s9, 4
    // Predicated region
    $region13: #{tpu_custom_call.1} parent=5 // pred_check
      %p141 = pneg %p140
    $region14: #{tpu_custom_call.1} parent=5 // pred_check_branch
      %143 = sbr.rel (%p141) target = $region16
    $region15: #{tpu_custom_call.1} parent=5 // pred_region
      // Predicated region
      $region17: #{tpu_custom_call.1} parent=15 // pred_check
        %p144 = pneg %p41
      $region18: #{tpu_custom_call.1} parent=15 // pred_check_branch
        %146 = sbr.rel (%p144) target = $region20
      $region19: #{tpu_custom_call.1} parent=15 // pred_region
        %s147 = smul.u32 4, %s16
        %p148 = scmp.lt.s32.totalorder %s147, 7
        %s149 = scalar_select %p148, %s147, 7
        %s150 = smul.addr %s149, 4
        %s151 = scalar_lea.vmem %s0, %s150
        %s152 = smul.u32 4, %s16
      $region20: #{tpu_custom_call.1} parent=15 // pred_fallthru
        _
      // Predicated region
      $region21: #{tpu_custom_call.1} parent=15 // pred_check
        %p153 = pneg %p67
      $region22: #{tpu_custom_call.1} parent=15 // pred_check_branch
        %155 = sbr.rel (%p153) target = $region24
      $region23: #{tpu_custom_call.1} parent=15 // pred_region
        %s156 = smul.u32 4, %s17
        %p157 = scmp.lt.s32.totalorder %s156, 7
        %s158 = scalar_select %p157, %s156, 7
        %s159 = smul.addr %s158, 4
        %s160 = scalar_lea.vmem %s1, %s159
        %s161 = smul.u32 4, %s17
      $region24: #{tpu_custom_call.1} parent=15 // pred_fallthru
        _
      // Predicated region
      $region25: #{tpu_custom_call.1} parent=15 // pred_check
        %p162 = pneg %p93
      $region26: #{tpu_custom_call.1} parent=15 // pred_check_branch
        %164 = sbr.rel (%p162) target = $region28
      $region27: #{tpu_custom_call.1} parent=15 // pred_region
        %s165 = smul.u32 4, %s16
        %p166 = scmp.lt.s32.totalorder %s165, 7
        %s167 = scalar_select %p166, %s165, 7
        %s168 = smul.addr %s167, 8
        %s169 = scalar_lea.vmem %s2, %s168
        %s170 = smul.u32 4, %s16
      $region28: #{tpu_custom_call.1} parent=15 // pred_fallthru
        _
    $region16: #{tpu_custom_call.1} parent=5 // pred_fallthru
      _
    %p171 = scmp.le.s32.totalorder 1, %s9
    %p172 = scmp.lt.s32.totalorder %s9, 5
    %p173 = pnand %p171, %p172
    %p174 = pneg %p173
    // Predicated region
    $region29: #{tpu_custom_call.1} parent=5 // pred_check
      _
    $region30: #{tpu_custom_call.1} parent=5 // pred_check_branch
      %176 = sbr.rel (%p173) target = $region32
    $region31: #{tpu_custom_call.1} parent=5 // pred_region
      %s177 = ssub.s32 %s9, 1
      %s178 = smul.u32 4, %s18
      %p179 = scmp.lt.s32.totalorder %s178, 7
      %s180 = scalar_select %p179, %s178, 7
      %s181 = smul.addr %s180, 4
      %s182 = scalar_lea.vmem %s0, %s181
      %p183 = pneg %p47
      %p184 = pneg %p44
      %s185 = smul.u32 4, %s19
      %p186 = scmp.lt.s32.totalorder %s185, 7
      %s187 = scalar_select %p186, %s185, 7
      %s188 = smul.addr %s187, 4
      %s189 = scalar_lea.vmem %s1, %s188
      %p190 = pneg %p73
      %p191 = pneg %p70
      %s192 = smul.u32 4, %s18
      %p193 = scmp.lt.s32.totalorder %s192, 7
      %s194 = scalar_select %p193, %s192, 7
      %s195 = smul.addr %s194, 8
      %s196 = scalar_lea.vmem %s2, %s195
      %p197 = pneg %p99
      %p198 = pneg %p96
      %p199 = pneg %p125
      %p200 = pneg %p122
      %s201 = smul.u32 4, %s18
      %p202 = scmp.lt.s32.totalorder %s201, 7
      %s203 = scalar_select %p202, %s201, 7
      %s204 = smul.addr %s203, 8
      %s205 = scalar_lea.vmem %s3, %s204
      %s206 = smul.u32 4, %s18
      %p207 = scmp.lt.s32.totalorder %s206, 7
      %s208 = scalar_select %p207, %s206, 7
      %s209 = smul.addr %s208, 4
      %s210 = scalar_lea.vmem %s0, %s209
      %s211 = smul.u32 4, %s18
      %s212 = smul.u32 4, %s19
      %p213 = scmp.lt.s32.totalorder %s212, 7
      %s214 = scalar_select %p213, %s212, 7
      %s215 = smul.addr %s214, 4
      %s216 = scalar_lea.vmem %s1, %s215
      %s217 = smul.u32 4, %s19
      %s218 = smul.u32 4, %s18
      %p219 = scmp.lt.s32.totalorder %s218, 7
      %s220 = scalar_select %p219, %s218, 7
      %s221 = smul.addr %s220, 8
      %s222 = scalar_lea.vmem %s2, %s221
      %s223 = smul.u32 4, %s18
      %s224 = smul.u32 4, %s18
      %p225 = scmp.lt.s32.totalorder %s224, 7
      %s226 = scalar_select %p225, %s224, 7
      %s227 = smul.addr %s226, 8
      %s228 = scalar_lea.vmem %s3, %s227
      %s229 = smul.u32 4, %s18
      %p231 = scmp.eq.s32.totalorder %s19, 0
      // Predicated region
      $region33: #{tpu_custom_call.1} parent=31 // pred_check
        %p232 = pneg %p231
      $region34: #{tpu_custom_call.1} parent=31 // pred_check_branch
        %234 = sbr.rel (%p232) target = $region36
      $region35: #{tpu_custom_call.1} parent=31 // pred_region
        %vm235 = vcmask 7168
        %236 = vst.msk [vmem:[#allocation2] sm:$0xff] %vm235, -1e+30
        %237 = vst.msk [vmem:[#allocation2 + $0x8] sm:$0xff] %vm235, -1e+30
        %238 = vst.msk [vmem:[#allocation2 + $0x10] sm:$0xff] %vm235, -1e+30
        %239 = vst.msk [vmem:[#allocation2 + $0x18] sm:$0xff] %vm235, -1e+30
        %240 = vst.msk [vmem:[#allocation3] sm:$0xff] %vm235, 0.0
        %241 = vst.msk [vmem:[#allocation3 + $0x8] sm:$0xff] %vm235, 0.0
        %242 = vst.msk [vmem:[#allocation3 + $0x10] sm:$0xff] %vm235, 0.0
        %243 = vst.msk [vmem:[#allocation3 + $0x18] sm:$0xff] %vm235, 0.0
      $region36: #{tpu_custom_call.1} parent=31 // pred_fallthru
        _
      %v244 = vld [vmem:[%s210] sm:$0xf]
      %v245 = vld [vmem:[%s210 + $0x4] sm:$0xf]
      %v246 = vld [vmem:[%s210 + $0x8] sm:$0xf]
      %v247 = vld [vmem:[%s210 + $0xc] sm:$0xf]
      %v248 = vld [vmem:[%s216] sm:$0xf]
      %v249 = vld [vmem:[%s216 + $0x4] sm:$0xf]
      %v250 = vld [vmem:[%s216 + $0x8] sm:$0xf]
      %v251 = vld [vmem:[%s216 + $0xc] sm:$0xf]
      %v256 = vunpack.c.l.b16 %v244
      %v257 = vunpack.c.l.b16 %v245
      %v258 = vunpack.c.l.b16 %v246
      %v259 = vunpack.c.l.b16 %v247
      %v260 = vpack.c.b16 %v257, %v256
      %v261 = vpack.c.b16 %v259, %v258
      %v268 = vunpack.c.l.b16 %v248
      %v269 = vunpack.c.l.b16 %v249
      %v270 = vunpack.c.l.b16 %v250
      %v271 = vunpack.c.l.b16 %v251
      %v272 = vpack.c.b16 %v269, %v268
      %v273 = vpack.c.b16 %v271, %v270
      %276 = vmatprep.subr.bf16.mxu0 0
      %277 = vmatpush1.bf16.xpose.msra.mxu0 0
      %278 = vmatprep.subr.bf16.mxu0 0
      %279 = vmatpush1.bf16.xpose.msra.mxu0 0
      %280 = vmatprep.subr.bf16.mxu0 0
      %281 = vmatpush1.bf16.xpose.msra.mxu0 0
      %282 = vmatprep.subr.bf16.mxu0 0
      %283 = vmatpush1.bf16.xpose.msra.mxu0 0
      %284 = vmatprep.subr.bf16.mxu0 0
      %285 = vmatpush1.bf16.xpose.msra.mxu0 0
      %286 = vmatprep.subr.bf16.mxu0 0
      %287 = vmatpush1.bf16.xpose.msra.mxu0 0
      %288 = vmatprep.subr.bf16.mxu0 0
      %289 = vmatpush1.bf16.xpose.msra.mxu0 %v273
      %290 = vmatprep.subr.bf16.mxu0 0
      %291 = vmatpush1.bf16.xpose.msra.mxu0 %v272
      %292 = vmatprep.subr.bf16.mxu0 0
      %293 = vmatpush2.bf16.xpose.msra.mxu0 0
      %294 = vmatprep.subr.bf16.mxu0 0
      %295 = vmatpush2.bf16.xpose.msra.mxu0 0
      %296 = vmatprep.subr.bf16.mxu0 0
      %297 = vmatpush2.bf16.xpose.msra.mxu0 0
      %298 = vmatprep.subr.bf16.mxu0 0
      %299 = vmatpush2.bf16.xpose.msra.mxu0 0
      %300 = vmatprep.subr.bf16.mxu0 0
      %301 = vmatpush2.bf16.xpose.msra.mxu0 0
      %302 = vmatprep.subr.bf16.mxu0 0
      %303 = vmatpush2.bf16.xpose.msra.mxu0 0
      %304 = vmatprep.subr.bf16.mxu0 0
      %305 = vmatpush2.bf16.xpose.msra.mxu0 0
      %306 = vmatprep.subr.bf16.mxu0 0
      %307 = vmatpush2.bf16.xpose.msra.mxu0 0
      %308 = vmatprep.mubr.bf16.mxu0 0
      %309 = vmatmul.mubr.bf16.gmra.mxu0 %v260
      %v310 = vpop.f32.mrf.mxu0
      %v311 = vadd.f32 0.0, %v310
      %v312 = vpop.f32.mrf.mxu0
      %v313 = vpop.f32.mrf.mxu0
      %v314 = vadd.f32 0.0, %v313
      %v315 = vpop.f32.mrf.mxu0
      %316 = vmatprep.mubr.bf16.mxu0 0
      %317 = vmatmul.mubr.bf16.gmra.mxu0 %v261
      %v318 = vpop.f32.mrf.mxu0
      %v319 = vadd.f32 0.0, %v318
      %v320 = vpop.f32.mrf.mxu0
      %v321 = vpop.f32.mrf.mxu0
      %v322 = vadd.f32 0.0, %v321
      %v323 = vpop.f32.mrf.mxu0
      %324 = vdwg.mxu0
      %v325 = vmul.f32 %v311, 2.0
      %v326 = vmul.f32 %v314, 2.0
      %v327 = vmul.f32 %v319, 2.0
      %v328 = vmul.f32 %v322, 2.0
      %s329 = smul.u32 %s18, 32
      %v330 = vlaneseq
      %v331 = vshrl.u32 %v330, 7
      %v332 = vadd.s32 %v331, 8
      %v333 = vadd.s32 %v331, 16
      %v334 = vadd.s32 %v331, 24
      %v335 = vstv %s329
      %v336 = vadd.s32 %v335, %v331
      %v337 = vadd.s32 %v335, %v332
      %v338 = vadd.s32 %v335, %v333
      %v339 = vadd.s32 %v335, %v334
      %s340 = smul.u32 %s19, 32
      %v341 = vlaneseq
      %v342 = vand.u32 %v341, 127
      %v343 = vstv %s340
      %v344 = vadd.s32 %v343, %v342
      %vm345 = vcmp.eq.s32.totalorder %v336, %v344
      %vm346 = vcmp.eq.s32.totalorder %v337, %v344
      %vm347 = vcmp.eq.s32.totalorder %v338, %v344
      %vm348 = vcmp.eq.s32.totalorder %v339, %v344
      %vm349 = vcmp.ge.s32.totalorder %v344, 40
      %vm350 = vmor %vm345, %vm349
      %vm351 = vmor %vm346, %vm349
      %vm352 = vmor %vm347, %vm349
      %vm353 = vmor %vm348, %vm349
      %v354 = vsel %vm350, -1e+30, %v325
      %v355 = vsel %vm351, -1e+30, %v326
      %v356 = vsel %vm352, -1e+30, %v327
      %v357 = vsel %vm353, -1e+30, %v328
      %v358 = vld [vmem:[#allocation2] sm:$0xff]
      %v359 = vld [vmem:[#allocation2 + $0x8] sm:$0xff]
      %v360 = vld [vmem:[#allocation2 + $0x10] sm:$0xff]
      %v361 = vld [vmem:[#allocation2 + $0x18] sm:$0xff]
      %vm362 = vcmask 261120
      %v363 = vsel %vm362, %v354, -inf
      %364 = vmax.xlane.f32.xlu0 %v363
      %v365 = vpop.xlane.xlu0 %364
      %v366 = vsel %vm362, %v355, -inf
      %367 = vmax.xlane.f32.xlu0 %v366
      %v368 = vpop.xlane.xlu0 %367
      %v369 = vsel %vm362, %v356, -inf
      %370 = vmax.xlane.f32.xlu0 %v369
      %v371 = vpop.xlane.xlu0 %370
      %v372 = vsel %vm362, %v357, -inf
      %373 = vmax.xlane.f32.xlu0 %v372
      %v374 = vpop.xlane.xlu0 %373
      %v375 = vmax.f32 %v358, %v365
      %v376 = vmax.f32 %v359, %v368
      %v377 = vmax.f32 %v360, %v371
      %v378 = vmax.f32 %v361, %v374
      %v379 = vsub.f32 %v358, %v375
      %v380 = vsub.f32 %v359, %v376
      %v381 = vsub.f32 %v360, %v377
      %v382 = vsub.f32 %v361, %v378
      %v383 = vmul.f32 %v379, 1.442695
      %v384 = vpow.pop %v383
      %v385 = vmul.f32 %v380, 1.442695
      %v386 = vpow.pop %v385
      %v387 = vmul.f32 %v381, 1.442695
      %v388 = vpow.pop %v387
      %v389 = vmul.f32 %v382, 1.442695
      %v390 = vpow.pop %v389
      %392 = vset.pattern.permute.xlu0 0
      %393 = vperm.xlu0 %392, %v375
      %v394 = vpop.permute.xlu0 %393
      %397 = vset.pattern.permute.xlu0 0
      %398 = vperm.xlu0 %397, %v376
      %v399 = vpop.permute.xlu0 %398
      %402 = vset.pattern.permute.xlu0 0
      %403 = vperm.xlu0 %402, %v377
      %v404 = vpop.permute.xlu0 %403
      %407 = vset.pattern.permute.xlu0 0
      %408 = vperm.xlu0 %407, %v378
      %v409 = vpop.permute.xlu0 %408
      %v411 = vsub.f32 %v354, %v394
      %v412 = vsub.f32 %v355, %v399
      %v413 = vsub.f32 %v356, %v404
      %v414 = vsub.f32 %v357, %v409
      %v415 = vmul.f32 %v411, 1.442695
      %v416 = vpow.pop %v415
      %v417 = vmul.f32 %v412, 1.442695
      %v418 = vpow.pop %v417
      %v419 = vmul.f32 %v413, 1.442695
      %v420 = vpow.pop %v419
      %v421 = vmul.f32 %v414, 1.442695
      %v422 = vpow.pop %v421
      %v423 = vld [vmem:[#allocation3] sm:$0xff]
      %v424 = vld [vmem:[#allocation3 + $0x8] sm:$0xff]
      %v425 = vld [vmem:[#allocation3 + $0x10] sm:$0xff]
      %v426 = vld [vmem:[#allocation3 + $0x18] sm:$0xff]
      %v427 = vmul.f32 %v384, %v423
      %v428 = vmul.f32 %v386, %v424
      %v429 = vmul.f32 %v388, %v425
      %v430 = vmul.f32 %v390, %v426
      %v431 = vsel %vm362, %v416, 0.0
      %432 = vadd.xlane.f32.xlu0 %v431
      %v433 = vpop.xlane.xlu0 %432
      %v434 = vsel %vm362, %v418, 0.0
      %435 = vadd.xlane.f32.xlu0 %v434
      %v436 = vpop.xlane.xlu0 %435
      %v437 = vsel %vm362, %v420, 0.0
      %438 = vadd.xlane.f32.xlu0 %v437
      %v439 = vpop.xlane.xlu0 %438
      %v440 = vsel %vm362, %v422, 0.0
      %441 = vadd.xlane.f32.xlu0 %v440
      %v442 = vpop.xlane.xlu0 %441
      %v443 = vadd.f32 %v427, %v433
      %v444 = vadd.f32 %v428, %v436
      %v445 = vadd.f32 %v429, %v439
      %v446 = vadd.f32 %v430, %v442
      %vm447 = vcmask 7168
      %448 = vst.msk [vmem:[#allocation3] sm:$0xff] %vm447, %v443
      %449 = vst.msk [vmem:[#allocation3 + $0x8] sm:$0xff] %vm447, %v444
      %450 = vst.msk [vmem:[#allocation3 + $0x10] sm:$0xff] %vm447, %v445
      %451 = vst.msk [vmem:[#allocation3 + $0x18] sm:$0xff] %vm447, %v446
      %452 = vst.msk [vmem:[#allocation2] sm:$0xff] %vm447, %v375
      %453 = vst.msk [vmem:[#allocation2 + $0x8] sm:$0xff] %vm447, %v376
      %454 = vst.msk [vmem:[#allocation2 + $0x10] sm:$0xff] %vm447, %v377
      %455 = vst.msk [vmem:[#allocation2 + $0x18] sm:$0xff] %vm447, %v378
      %p456 = scmp.eq.s32.totalorder %s19, 1
      // Predicated region
      $region37: #{tpu_custom_call.1} parent=31 // pred_check
        %p457 = pneg %p456
      $region38: #{tpu_custom_call.1} parent=31 // pred_check_branch
        %459 = sbr.rel (%p457) target = $region40
      $region39: #{tpu_custom_call.1} parent=31 // pred_region
        %v460 = vld [vmem:[#allocation2] sm:$0xff]
        %v461 = vld [vmem:[#allocation2 + $0x8] sm:$0xff]
        %v462 = vld [vmem:[#allocation2 + $0x10] sm:$0xff]
        %v463 = vld [vmem:[#allocation2 + $0x18] sm:$0xff]
        %v464 = vld [vmem:[#allocation3] sm:$0xff]
        %v465 = vld [vmem:[#allocation3 + $0x8] sm:$0xff]
        %v466 = vld [vmem:[#allocation3 + $0x10] sm:$0xff]
        %v467 = vld [vmem:[#allocation3 + $0x18] sm:$0xff]
        %v468 = vlog2.pop %v464
        %v469 = vmul.f32 %v468, 0.6931472
        %v470 = vlog2.pop %v465
        %v471 = vmul.f32 %v470, 0.6931472
        %v472 = vlog2.pop %v466
        %v473 = vmul.f32 %v472, 0.6931472
        %v474 = vlog2.pop %v467
        %v475 = vmul.f32 %v474, 0.6931472
        %v476 = vadd.f32 %v460, %v469
        %v477 = vadd.f32 %v461, %v471
        %v478 = vadd.f32 %v462, %v473
        %v479 = vadd.f32 %v463, %v475
        %v480 = vld [vmem:[%s222] sm:$0xff]
        %v481 = vld [vmem:[%s222 + $0x8] sm:$0xff]
        %v482 = vld [vmem:[%s222 + $0x10] sm:$0xff]
        %v483 = vld [vmem:[%s222 + $0x18] sm:$0xff]
        %v484 = vmul.f32 %v480, 2.0
        %v485 = vmul.f32 %v481, 2.0
        %v486 = vmul.f32 %v482, 2.0
        %v487 = vmul.f32 %v483, 2.0
        %v488 = vsub.f32 %v476, %v484
        %v489 = vsub.f32 %v477, %v485
        %v490 = vsub.f32 %v478, %v486
        %v491 = vsub.f32 %v479, %v487
        %492 = vst.msk [vmem:[%s228] sm:$0xff] %vm447, %v488
        %493 = vst.msk [vmem:[%s228 + $0x8] sm:$0xff] %vm447, %v489
        %494 = vst.msk [vmem:[%s228 + $0x10] sm:$0xff] %vm447, %v490
        %495 = vst.msk [vmem:[%s228 + $0x18] sm:$0xff] %vm447, %v491
      $region40: #{tpu_custom_call.1} parent=31 // pred_fallthru
        _
      %s496 = smul.u32 4, %s18
      %p497 = scmp.lt.s32.totalorder %s496, 7
      %s498 = scalar_select %p497, %s496, 7
      %s499 = smul.addr %s498, 8
      %s500 = scalar_lea.vmem %s3, %s499
      // Predicated region
      $region41: #{tpu_custom_call.1} parent=31 // pred_check
        %p501 = pneg %p122
      $region42: #{tpu_custom_call.1} parent=31 // pred_check_branch
        %503 = sbr.rel (%p501) target = $region44
      $region43: #{tpu_custom_call.1} parent=31 // pred_region
        %s504 = smul.u32 4, %s18
      $region44: #{tpu_custom_call.1} parent=31 // pred_fallthru
        _
    $region32: #{tpu_custom_call.1} parent=5 // pred_fallthru
      _
    %p505 = scmp.le.s32.totalorder 2, %s9
    // Predicated region
    $region45: #{tpu_custom_call.1} parent=5 // pred_check
      %p506 = pneg %p505
    $region46: #{tpu_custom_call.1} parent=5 // pred_check_branch
      %508 = sbr.rel (%p506) target = $region48
    $region47: #{tpu_custom_call.1} parent=5 // pred_region
      %s509 = ssub.s32 %s9, 2
      // Predicated region
      $region49: #{tpu_custom_call.1} parent=47 // pred_check
        %p510 = pneg %p128
      $region50: #{tpu_custom_call.1} parent=47 // pred_check_branch
        %512 = sbr.rel (%p510) target = $region52
      $region51: #{tpu_custom_call.1} parent=47 // pred_region
        %s513 = smul.u32 4, %s20
        %p514 = scmp.lt.s32.totalorder %s513, 7
        %s515 = scalar_select %p514, %s513, 7
        %s516 = smul.addr %s515, 8
        %s517 = scalar_lea.vmem %s3, %s516
      $region52: #{tpu_custom_call.1} parent=47 // pred_fallthru
        _
    $region48: #{tpu_custom_call.1} parent=5 // pred_fallthru
      _
  $region6: #{tpu_custom_call.1} parent=0 // loop_footer
    %s13 = sadd.s32 1, %s9
  $region7: #{tpu_custom_call.1} parent=0 // loop_footer_branch
    %8 = sbr.rel target = $region3
  $region8: #{tpu_custom_call.1} parent=0 // loop_exit
    _

</llo_original>
